<compile_context>
chip_gen: v6e
topology: v6e:2x2x1
jax: 0.10.0
libtpu: 0.0.40
codegen_flags: <defaults>
</compile_context>

<pallas_src>
import functools

import jax
import jax.numpy as jnp
from jax.experimental import pallas as pl
from jax.experimental.pallas import tpu as pltpu


def _round_up(x, m):
    return ((x + m - 1) // m) * m


def _largest_divisor_tile(dim, align, cap):
    """Largest multiple of `align` that divides `dim` and is <= cap.

    `dim` must itself be a multiple of `align`, so the result is >= align."""
    cap = max(align, min(cap, dim))
    best = align
    for t in range(align, cap + 1, align):
        if dim % t == 0:
            best = t
    return best


def _vmem_limit_bytes():
    """Per-generation scoped-VMEM limit: ~100 MiB on v5e/v6e (128 MiB
    physical), ~48 MiB on v7x (64 MiB per-TC). Falls back to 48 MiB."""
    try:
        cap = int(pltpu.get_tpu_info().vmem_capacity_bytes)
    except Exception:
        cap = 64 << 20
    return max(32 << 20, min(cap - (16 << 20), 100 << 20))


# ---------------------------------------------------------------------------
# Kernels
# ---------------------------------------------------------------------------

def _linear_relu_kernel(x_ref, w_ref, b_ref, o_ref):
    """Weight-resident fast path: single K step, direct write."""
    acc = jnp.dot(x_ref[...], w_ref[...], preferred_element_type=jnp.float32)
    o_ref[...] = jnp.maximum(acc + b_ref[...], 0.0).astype(o_ref.dtype)


def _linear_relu_acc_kernel(x_ref, w_ref, b_ref, o_ref, acc_ref):
    """General path: K grid axis with fp32 VMEM accumulator."""
    k = pl.program_id(2)
    part = jnp.dot(x_ref[...], w_ref[...], preferred_element_type=jnp.float32)

    @pl.when(k == 0)
    def _():
        acc_ref[...] = part            # assign-on-first-k (no zero-init pass)

    @pl.when(k > 0)
    def _():
        acc_ref[...] = acc_ref[...] + part

    @pl.when(k == pl.num_programs(2) - 1)
    def _():
        o_ref[...] = jnp.maximum(acc_ref[...] + b_ref[...], 0.0).astype(o_ref.dtype)


# ---------------------------------------------------------------------------
# Wrapper
# ---------------------------------------------------------------------------

def prepare_linear_block_params(weight, bias, compute_dtype=jnp.float32):
    """One-time param prep: pad in_dim/out_dim to 128 multiples and
    pre-transpose the PyTorch [out_dim, in_dim] weight to [K_p, N_p]."""
    N, K = weight.shape
    K_p, N_p = _round_up(K, 128), _round_up(N, 128)
    w = weight
    if (N, K) != (N_p, K_p):
        w = jnp.pad(w, ((0, N_p - N), (0, K_p - K)))
    w_t = jnp.asarray(w.T, dtype=compute_dtype)            # [K_p, N_p]
    b = bias if N == N_p else jnp.pad(bias, (0, N_p - N))
    b2d = jnp.asarray(b, jnp.float32).reshape(1, N_p)
    return w_t, b2d


def linear_block_forward(x, w_t, b2d, out_dim):
    """Forward of LinearBlock(norm='none', activation='relu').

    x:    [..., in_dim]
    w_t:  [K_p, N_p]   pre-transposed, padded weight (prepare_linear_block_params)
    b2d:  [1, N_p]     padded bias
    returns [..., out_dim]
    """
    orig_shape = x.shape
    K = orig_shape[-1]
    x2d = x.reshape(-1, K)
    M = x2d.shape[0]
    K_p, N_p = w_t.shape
    assert K <= K_p, "in_dim larger than prepared weight"

    M_p = _round_up(max(M, 1), 8)

    in_dtype = w_t.dtype
    in_bytes = jnp.dtype(in_dtype).itemsize
    out_dtype = x.dtype
    out_bytes = jnp.dtype(out_dtype).itemsize

    xp = x2d.astype(in_dtype)
    if (M_p, K_p) != (M, K):
        # K padding keeps the contraction exact; padded M rows are sliced off.
        xp = jnp.pad(xp, ((0, M_p - M), (0, K_p - K)))

    vmem_limit = _vmem_limit_bytes()
    budget = vmem_limit - (8 << 20)

    def footprint(tm, tn, tk, with_scratch):
        f = 2 * (tm * tk * in_bytes + tk * tn * in_bytes + tm * tn * out_bytes)
        f += 2 * tn * 4
        if with_scratch:
            f += tm * tn * 4
        return f

    tm = _largest_divisor_tile(M_p, 8, 1024)
    tn = _largest_divisor_tile(N_p, 128, 512)

    # --- weight-resident single-K-step fast path ---------------------------
    fast_tm, fast_tn = tm, tn
    while footprint(fast_tm, fast_tn, K_p, False) > budget and fast_tm > 8:
        fast_tm = _largest_divisor_tile(M_p, 8, max(8, fast_tm // 2))
    while footprint(fast_tm, fast_tn, K_p, False) > budget and fast_tn > 128:
        fast_tn = _largest_divisor_tile(N_p, 128, max(128, fast_tn // 2))
    use_fast = footprint(fast_tm, fast_tn, K_p, False) <= budget

    cost = pl.CostEstimate(
        flops=2 * M_p * N_p * K_p,
        transcendentals=0,
        bytes_accessed=in_bytes * (M_p * K_p + K_p * N_p) + out_bytes * M_p * N_p)

    if use_fast:
        tm, tn = fast_tm, fast_tn
        # v7x megacore: expose at least 2 parallel blocks when possible.
        if M_p == tm and N_p == tn and tn >= 256:
            tn //= 2
        grid = (M_p // tm, N_p // tn)
        out_p = pl.pallas_call(
            _linear_relu_kernel,
            out_shape=jax.ShapeDtypeStruct((M_p, N_p), out_dtype),
            grid=grid,
            in_specs=[
                pl.BlockSpec((tm, K_p), lambda i, j: (i, 0)),   # x
                pl.BlockSpec((K_p, tn), lambda i, j: (0, j)),   # W^T [K, N]
                pl.BlockSpec((1, tn), lambda i, j: (0, j)),     # bias
            ],
            out_specs=pl.BlockSpec((tm, tn), lambda i, j: (i, j)),
            compiler_params=pltpu.CompilerParams(
                dimension_semantics=("parallel", "parallel"),
                vmem_limit_bytes=vmem_limit),
            cost_estimate=cost,
        )(xp, w_t, b2d)
    else:
        tk = _largest_divisor_tile(K_p, 128, 1024)
        while footprint(tm, tn, tk, True) > budget and tk > 128:
            tk = _largest_divisor_tile(K_p, 128, max(128, tk // 2))
        while footprint(tm, tn, tk, True) > budget and tm > 8:
            tm = _largest_divisor_tile(M_p, 8, max(8, tm // 2))
        while footprint(tm, tn, tk, True) > budget and tn > 128:
            tn = _largest_divisor_tile(N_p, 128, max(128, tn // 2))
        grid = (M_p // tm, N_p // tn, K_p // tk)
        out_p = pl.pallas_call(
            _linear_relu_acc_kernel,
            out_shape=jax.ShapeDtypeStruct((M_p, N_p), out_dtype),
            grid=grid,
            in_specs=[
                pl.BlockSpec((tm, tk), lambda i, j, k: (i, k)),   # x
                pl.BlockSpec((tk, tn), lambda i, j, k: (k, j)),   # W^T [K, N]
                pl.BlockSpec((1, tn), lambda i, j, k: (0, j)),    # bias
            ],
            out_specs=pl.BlockSpec((tm, tn), lambda i, j, k: (i, j)),
            scratch_shapes=[pltpu.VMEM((tm, tn), jnp.float32)],
            compiler_params=pltpu.CompilerParams(
                dimension_semantics=("parallel", "parallel", "arbitrary"),
                vmem_limit_bytes=vmem_limit),
            cost_estimate=cost,
        )(xp, w_t, b2d)

    out = out_p[:M, :out_dim]
    return out.reshape(*orig_shape[:-1], out_dim)


# TODO(synk): norm='bn'/'in' and activation='lrelu'/'tanh'/'none' branches of
# LinearBlock are not implemented; default config (norm='none', relu) only.


def reference_forward(x, weight, bias):
    return jnp.maximum(x @ weight.T + bias[None, :], 0.0)


if __name__ == "__main__":
    # Small shapes consistent with nn.Linear: batch=8, in_dim=32, out_dim=32
    batch, in_dim, out_dim = 8, 32, 32

    key = jax.random.PRNGKey(0)
    kx, kw, kb = jax.random.split(key, 3)

    bound = 1.0 / (in_dim ** 0.5)
    x = jax.random.normal(kx, (batch, in_dim), dtype=jnp.float32)
    weight = jax.random.uniform(kw, (out_dim, in_dim), jnp.float32, -bound, bound)
    bias = jax.random.uniform(kb, (out_dim,), jnp.float32, -bound, bound)

    # One-time parameter prep (pad + [K, N] transpose), outside the forward.
    w_t, b2d = prepare_linear_block_params(weight, bias)

    fwd = jax.jit(functools.partial(linear_block_forward, out_dim=out_dim))
    out = jax.block_until_ready(fwd(x, w_t, b2d))

    ref = reference_forward(x, weight, bias)
    assert out.shape == (batch, out_dim)
    assert jnp.allclose(out, ref, atol=1e-5, rtol=1e-5), "mismatch vs reference"

    print("KERNEL_OK")
</pallas_src>

<mosaic_0001>
module attributes {stable_mosaic.version = 11 : i64} {
  func.func @_linear_relu_kernel(%arg0: i32, %arg1: i32, %arg2: memref<8x128xf32, #tpu.memory_space<vmem>>, %arg3: memref<128x128xf32, #tpu.memory_space<vmem>>, %arg4: memref<1x128xf32, #tpu.memory_space<vmem>>, %arg5: memref<8x128xf32, #tpu.memory_space<vmem>>) attributes {dimension_semantics = [#tpu.dimension_semantics<parallel>, #tpu.dimension_semantics<parallel>], iteration_bounds = array<i64: 1, 1>, scalar_prefetch = 0 : i64, scratch_operands = 0 : i64, tpu.core_type = #tpu.core_type<tc>, window_params = [{transform_indices = @transform_0, window_bounds = array<i64: 8, 128>}, {transform_indices = @transform_1, window_bounds = array<i64: 128, 128>}, {transform_indices = @transform_2, window_bounds = array<i64: 1, 128>}, {transform_indices = @transform_3, window_bounds = array<i64: 8, 128>}]} {
    %c0 = arith.constant 0 : index
    %c0_0 = arith.constant 0 : index
    %0 = vector.load %arg2[%c0, %c0_0] : memref<8x128xf32, #tpu.memory_space<vmem>>, vector<8x128xf32>
    %c0_1 = arith.constant 0 : index
    %c0_2 = arith.constant 0 : index
    %1 = vector.load %arg3[%c0_1, %c0_2] : memref<128x128xf32, #tpu.memory_space<vmem>>, vector<128x128xf32>
    %cst = arith.constant dense<0.000000e+00> : vector<8x128xf32>
    %2 = tpu.matmul %0, %1, %cst {dimension_numbers = #tpu.dot_dimension_numbers<[1], [0], [0], [1], [0, 0, 1, 1], [], []>} : vector<8x128xf32>, vector<128x128xf32>, vector<8x128xf32> -> vector<8x128xf32>
    %c0_3 = arith.constant 0 : index
    %c0_4 = arith.constant 0 : index
    %3 = vector.load %arg4[%c0_3, %c0_4] : memref<1x128xf32, #tpu.memory_space<vmem>>, vector<1x128xf32>
    %4 = vector.broadcast %3 : vector<1x128xf32> to vector<8x128xf32>
    %5 = arith.addf %2, %4 : vector<8x128xf32>
    %cst_5 = arith.constant 0.000000e+00 : f32
    %6 = vector.broadcast %cst_5 : f32 to vector<8x128xf32>
    %7 = arith.maximumf %5, %6 : vector<8x128xf32>
    %c0_6 = arith.constant 0 : index
    %c0_7 = arith.constant 0 : index
    %8 = vector.load %arg5[%c0_6, %c0_7] : memref<8x128xf32, #tpu.memory_space<vmem>>, vector<8x128xf32>
    tpu.vector_store %arg5[%c0_6, %c0_7], %7 {strides = array<i32>} : memref<8x128xf32, #tpu.memory_space<vmem>>, vector<8x128xf32>,
    return
  }
  func.func @transform_0(%arg0: i32, %arg1: i32) -> (i32, i32) {
    %c0_i32 = arith.constant 0 : i32
    %c0_i32_0 = arith.constant 0 : i32
    return %arg0, %c0_i32 : i32, i32
  }
  func.func @transform_1(%arg0: i32, %arg1: i32) -> (i32, i32) {
    %c0_i32 = arith.constant 0 : i32
    %c0_i32_0 = arith.constant 0 : i32
    return %c0_i32, %arg1 : i32, i32
  }
  func.func @transform_2(%arg0: i32, %arg1: i32) -> (i32, i32) {
    %c0_i32 = arith.constant 0 : i32
    %c0_i32_0 = arith.constant 0 : i32
    return %c0_i32, %arg1 : i32, i32
  }
  func.func @transform_3(%arg0: i32, %arg1: i32) -> (i32, i32) {
    %c0_i32 = arith.constant 0 : i32
    return %arg0, %arg1 : i32, i32
  }
}

</mosaic_0001>

<llo_original>
// kernel: linear_block_forward.1
$region0: #{linear_block_forward.1}
  #allocation0 [shape = 'u32[]', space=smem, size = 0x4, offset = 0x4, fixed_abs, tag = 'smem constant byte address 0x4 - core index']
  #allocation1 [shape = 'u32[144,128]{1,0:T(1,128)}', space=vmem, size = 0x12000, scoped, tag = 'internal scratch']
  %s0 = inlined_call_operand.vmem [shape: f32[8,128], index: 0, kind: input, shape index: {}]
  %s1 = inlined_call_operand.hbm [shape: f32[128,128], index: 1, kind: input, shape index: {}]
  %s2 = inlined_call_operand.vmem [shape: f32[1,128], index: 2, kind: input, shape index: {}]
  %s3 = inlined_call_operand.hbm [shape: f32[8,128], index: 3, kind: output, shape index: {}]
  %s4 = sld [smem:[#allocation0]]
  $region26: #{linear_block_forward.1} parent=0
    _
  %s6 = ssub.s32 1, %s4
  %s7 = scalar_select 0, %s6, %s4
  $region1: #{linear_block_forward.1} parent=0
    #allocation2 [shape = 'u8[65536]{0}', space=vmem, size = 0x10000, scoped, tag = 'input window, operand 1, single buffered']
    #allocation3 [shape = 's32[1]{0}', space=sflag, size = 0x4, scoped, tag = 'scoped memory for linear_block_forward.1']
    #allocation4 [shape = 's32[1]{0}', space=sflag, size = 0x4, scoped, tag = 'scoped memory for linear_block_forward.1']
    #allocation5 [shape = 'u8[4096]{0}', space=vmem, size = 0x1000, scoped, tag = 'output window, operand 0, single buffered']
    %8 = vsyncpa [#allocation3], 0
    %9 = vsyncpa [#allocation4], 0
    // Predicated region
    $region2: #{linear_block_forward.1} parent=1 // pred_check
      _
    $region3: #{linear_block_forward.1} parent=1 // pred_check_branch
      %11 = sbr.rel (0) target = $region5
    $region4: #{linear_block_forward.1} parent=1 // pred_region
      _
    $region5: #{linear_block_forward.1} parent=1 // pred_fallthru
      _
    // Predicated region
    $region6: #{linear_block_forward.1} parent=1 // pred_check
      _
    $region7: #{linear_block_forward.1} parent=1 // pred_check_branch
      %13 = sbr.rel (0) target = $region9
    $region8: #{linear_block_forward.1} parent=1 // pred_region
      %s15 = ssub.s32 2048, 2048
      %16 = vsyncadd [#allocation3], %s15
      %s17 = sshll.u32 [#allocation2], 4
      %s18 = int_to_ptr.vmem [resolvable:$true] %s17
      %23 = dma.hbm_to_vmem [thread:$0]  %s1, 2048, %s18, [#allocation3], 128, 128, 8
    $region9: #{linear_block_forward.1} parent=1 // pred_fallthru
      _
    // Predicated region
    $region10: #{linear_block_forward.1} parent=1 // pred_check
      _
    $region11: #{linear_block_forward.1} parent=1 // pred_check_branch
      %25 = sbr.rel (0) target = $region13
    $region12: #{linear_block_forward.1} parent=1 // pred_region
      _
    $region13: #{linear_block_forward.1} parent=1 // pred_fallthru
      _
    // Predicated region
    $region14: #{linear_block_forward.1} parent=1 // pred_check
      _
    $region15: #{linear_block_forward.1} parent=1 // pred_check_branch
      %27 = sbr.rel (0) target = $region17
    $region16: #{linear_block_forward.1} parent=1 // pred_region
      %28 = dma.done [#allocation3], 2048
    $region17: #{linear_block_forward.1} parent=1 // pred_fallthru
      _
    %v29 = vld [vmem:[%s0] sm:$0xff]
    %v30 = vld [vmem:[#allocation2] sm:$0xff]
    %v31 = vld [vmem:[#allocation2 + $0x8] sm:$0xff]
    %v32 = vld [vmem:[#allocation2 + $0x10] sm:$0xff]
    %v33 = vld [vmem:[#allocation2 + $0x18] sm:$0xff]
    %v34 = vld [vmem:[#allocation2 + $0x20] sm:$0xff]
    %v35 = vld [vmem:[#allocation2 + $0x28] sm:$0xff]
    %v36 = vld [vmem:[#allocation2 + $0x30] sm:$0xff]
    %v37 = vld [vmem:[#allocation2 + $0x38] sm:$0xff]
    %v38 = vld [vmem:[#allocation2 + $0x40] sm:$0xff]
    %v39 = vld [vmem:[#allocation2 + $0x48] sm:$0xff]
    %v40 = vld [vmem:[#allocation2 + $0x50] sm:$0xff]
    %v41 = vld [vmem:[#allocation2 + $0x58] sm:$0xff]
    %v42 = vld [vmem:[#allocation2 + $0x60] sm:$0xff]
    %v43 = vld [vmem:[#allocation2 + $0x68] sm:$0xff]
    %v44 = vld [vmem:[#allocation2 + $0x70] sm:$0xff]
    %v45 = vld [vmem:[#allocation2 + $0x78] sm:$0xff]
    %v46 = vld [vmem:[%s2] sm:$0x1]
    %v48 = vlaneseq
    %v49 = vshrl.u32 %v48, 7
    %v50 = vsub.s32 0, %v49
    %v51 = vrot.slane %v46, %v50
    %53 = vmatprep.subr.mxu0 0.0
    %54 = vmatpush1.msra.mxu0 %v45
    %55 = vmatprep.subr.mxu0 0.0
    %56 = vmatpush1.msra.mxu0 %v44
    %57 = vmatprep.subr.mxu0 0.0
    %58 = vmatpush1.msra.mxu0 %v43
    %59 = vmatprep.subr.mxu0 0.0
    %60 = vmatpush1.msra.mxu0 %v42
    %61 = vmatprep.subr.mxu0 0.0
    %62 = vmatpush1.msra.mxu0 %v41
    %63 = vmatprep.subr.mxu0 0.0
    %64 = vmatpush1.msra.mxu0 %v40
    %65 = vmatprep.subr.mxu0 0.0
    %66 = vmatpush1.msra.mxu0 %v39
    %67 = vmatprep.subr.mxu0 0.0
    %68 = vmatpush1.msra.mxu0 %v38
    %69 = vmatprep.subr.mxu0 0.0
    %70 = vmatpush1.msra.mxu0 %v37
    %71 = vmatprep.subr.mxu0 0.0
    %72 = vmatpush1.msra.mxu0 %v36
    %73 = vmatprep.subr.mxu0 0.0
    %74 = vmatpush1.msra.mxu0 %v35
    %75 = vmatprep.subr.mxu0 0.0
    %76 = vmatpush1.msra.mxu0 %v34
    %77 = vmatprep.subr.mxu0 0.0
    %78 = vmatpush1.msra.mxu0 %v33
    %79 = vmatprep.subr.mxu0 0.0
    %80 = vmatpush1.msra.mxu0 %v32
    %81 = vmatprep.subr.mxu0 0.0
    %82 = vmatpush1.msra.mxu0 %v31
    %83 = vmatprep.subr.mxu0 0.0
    %84 = vmatpush1.msra.mxu0 %v30
    %85 = vmatprep.subr.mxu0 0.0
    %86 = vmatpush2.msra.mxu0 0.0
    %87 = vmatprep.subr.mxu0 0.0
    %88 = vmatpush2.msra.mxu0 0.0
    %89 = vmatprep.subr.mxu0 0.0
    %90 = vmatpush2.msra.mxu0 0.0
    %91 = vmatprep.subr.mxu0 0.0
    %92 = vmatpush2.msra.mxu0 0.0
    %93 = vmatprep.subr.mxu0 0.0
    %94 = vmatpush2.msra.mxu0 0.0
    %95 = vmatprep.subr.mxu0 0.0
    %96 = vmatpush2.msra.mxu0 0.0
    %97 = vmatprep.subr.mxu0 0.0
    %98 = vmatpush2.msra.mxu0 0.0
    %99 = vmatprep.subr.mxu0 0.0
    %100 = vmatpush2.msra.mxu0 0.0
    %101 = vmatprep.subr.mxu0 0.0
    %102 = vmatpush2.msra.mxu0 0.0
    %103 = vmatprep.subr.mxu0 0.0
    %104 = vmatpush2.msra.mxu0 0.0
    %105 = vmatprep.subr.mxu0 0.0
    %106 = vmatpush2.msra.mxu0 0.0
    %107 = vmatprep.subr.mxu0 0.0
    %108 = vmatpush2.msra.mxu0 0.0
    %109 = vmatprep.subr.mxu0 0.0
    %110 = vmatpush2.msra.mxu0 0.0
    %111 = vmatprep.subr.mxu0 0.0
    %112 = vmatpush2.msra.mxu0 0.0
    %113 = vmatprep.subr.mxu0 0.0
    %114 = vmatpush2.msra.mxu0 0.0
    %115 = vmatprep.subr.mxu0 0.0
    %116 = vmatpush2.msra.mxu0 0.0
    %117 = vmatprep.mubr.f32.mxu0 0.0
    %118 = vmatmul.mubr.f32.gmra.mxu0 %v29
    %v119 = vpop.f32.mrf.mxu0
    %v120 = vadd.f32 %v51, %v119
    %v121 = vpop.f32.mrf.mxu0
    %122 = vdwg.mxu0
    %v123 = vmax.f32 %v120, 0.0
    %124 = vst [vmem:[#allocation5] sm:$0xff] %v123
    // Predicated region
    $region18: #{linear_block_forward.1} parent=1 // pred_check
      _
    $region19: #{linear_block_forward.1} parent=1 // pred_check_branch
      %126 = sbr.rel (0) target = $region21
    $region20: #{linear_block_forward.1} parent=1 // pred_region
      %s128 = ssub.s32 128, 128
      %129 = vsyncadd [#allocation4], %s128
      %s131 = sshll.u32 [#allocation5], 4
      %s132 = int_to_ptr.vmem [resolvable:$true] %s131
      %134 = dma.vmem_to_hbm [thread:$0]  %s132, 128, %s3, [#allocation4]
    $region21: #{linear_block_forward.1} parent=1 // pred_fallthru
      _
    // Predicated region
    $region22: #{linear_block_forward.1} parent=1 // pred_check
      _
    $region23: #{linear_block_forward.1} parent=1 // pred_check_branch
      %136 = sbr.rel (0) target = $region25
    $region24: #{linear_block_forward.1} parent=1 // pred_region
      %137 = dma.done [#allocation4], 128
    $region25: #{linear_block_forward.1} parent=1 // pred_fallthru
      _
    %138 = vsyncpa [#allocation3], 1
    %139 = vsyncpa [#allocation4], 1

</llo_original>
